<compile_context>
chip_gen: v5e
topology: v5e:2x2
jax: 0.10.0
libtpu: 0.0.40
codegen_flags: <defaults>
</compile_context>

<pallas_src>
import jax
import jax.numpy as jnp
from jax import lax
from jax.experimental import pallas as pl
from jax.experimental.pallas import tpu as pltpu


# ---------------------------------------------------------------------------
# Kernels
# ---------------------------------------------------------------------------
def _outconv_mxu_kernel(x_ref, w_ref, b_ref, o_ref):
    # x_ref: (Cin, TP)   pixel tile (channels on sublanes, pixels on lanes)
    # w_ref: (Cout, Cin) full weight, resident in VMEM
    # b_ref: (Cout, 1)   bias column (f32), resident in VMEM
    # o_ref: (Cout, TP)  lane-dense output tile
    acc = jnp.dot(w_ref[...], x_ref[...],
                  preferred_element_type=jnp.float32,
                  precision=jax.lax.Precision.HIGHEST)
    o_ref[...] = (acc + b_ref[...]).astype(o_ref.dtype)


def _make_vpu_kernel(cout, cin, tile_p, chunk):
    # Small-channel path: a (Cout<=8)x(Cin<=8) matmul wastes the MXU, so do
    # Cin*Cout scalar-broadcast FMAs on the VPU instead (hidden under the DMA).
    # Weights/bias are SMEM scalars.  Work is chunked along the lane axis so
    # vreg pressure stays ~(Cin+Cout)*chunk/1024 regardless of tile_p.
    n_chunks = tile_p // chunk
    unroll = min(n_chunks, 8)

    def kernel(x_ref, w_ref, b_ref, o_ref):
        # x_ref: (Cin, TP) VMEM, w_ref: (Cout, Cin) SMEM, b_ref: (Cout,) SMEM
        def body(c, carry):
            off = pl.multiple_of(c * chunk, 128)
            # Compute stays in f32 (safe on v5e, which lacks a bf16 VALU); the
            # chunking already bounds the upcast's vreg footprint.
            x = x_ref[:, pl.ds(off, chunk)].astype(jnp.float32)     # (Cin, chunk)
            rows = []
            for co in range(cout):                                  # trace-time unroll
                acc = x[0:1, :] * w_ref[co, 0]
                for ci in range(1, cin):
                    acc = acc + x[ci:ci + 1, :] * w_ref[co, ci]
                rows.append(acc + b_ref[co])
            out = jnp.concatenate(rows, axis=0)                     # (Cout, chunk)
            o_ref[:, pl.ds(off, chunk)] = out.astype(o_ref.dtype)
            return carry

        lax.fori_loop(0, n_chunks, body, 0, unroll=unroll)

    return kernel


# ---------------------------------------------------------------------------
# Tiling helpers
# ---------------------------------------------------------------------------
def _round_up(v, m):
    return ((v + m - 1) // m) * m


def _largest_div_tile(hw_pad, cap):
    """Largest multiple of 128 that divides hw_pad and is <= cap."""
    n = hw_pad // 128
    cap_blocks = max(1, min(cap // 128, n))
    best = 1
    for d in range(1, n + 1):
        if n % d == 0 and d <= cap_blocks:
            best = d
    return best * 128


def _pick_chunk(tile_p, max_chunk=2048):
    """Largest multiple of 128 dividing tile_p that is <= max_chunk."""
    best = 128
    d = 128
    while d <= min(tile_p, max_chunk):
        if tile_p % d == 0:
            best = d
        d += 128
    return best


def _vmem_budget_bytes():
    """Per-chip scratch budget for the double-buffered in/out blocks."""
    try:
        cap = pltpu.get_tpu_info().vmem_capacity_bytes
    except Exception:
        cap = None
    if cap is not None and cap >= 96 * 1024 * 1024:
        # v5e / v6e: 128 MiB physical VMEM -> spend it on bigger blocks.
        return 24 * 1024 * 1024
    # v7x (64 MiB physical / 32 MiB scoped default) or unknown: conservative.
    return 10 * 1024 * 1024


# ---------------------------------------------------------------------------
# Wrapper
# ---------------------------------------------------------------------------
def outconv_pallas(x_nchw, weight, bias, *, small_channel_threshold=8):
    """1x1 conv (OutConv.forward).

    x_nchw: (N, Cin, H, W); weight: (Cout, Cin, 1, 1); bias: (Cout,).
    Returns (N, Cout, H, W) in x's dtype.
    """
    N, Cin, H, W = x_nchw.shape
    Cout = weight.shape[0]
    HW = H * W
    itemsize = int(jnp.dtype(x_nchw.dtype).itemsize)

    # NCHW is already the right layout for (Cout,Cin)@(Cin,P): flatten spatial.
    x3 = x_nchw.reshape(N, Cin, HW)

    # Pad the pixel axis to a multiple of 128 so the block size is always a
    # 128-multiple that respects the VMEM budget (no full-HW escape hatch).
    HW_pad = _round_up(HW, 128)
    if HW_pad != HW:
        x3 = jnp.pad(x3, ((0, 0), (0, 0), (0, HW_pad - HW)))

    small = Cin <= small_channel_threshold and Cout <= small_channel_threshold

    # --- pixel-tile sizing: big, byte-budgeted blocks (main perf lever) ------
    budget = _vmem_budget_bytes()
    # Double-buffered x block + double-buffered out block must fit the budget.
    budget_cap = budget // (2 * (Cin + Cout) * itemsize)
    if small:
        # VPU path: 8K-16K pixels is plenty for tiny Cin and keeps the
        # unrolled chunk loop short.
        target_cap = 16384
    else:
        # MXU path: aim for ~4 MiB x blocks (near the HBM roofline).
        target_cap = (4 * 1024 * 1024) // max(1, Cin * itemsize)
    cap = max(128, min(budget_cap, target_cap))
    # v7x has 2 TensorCores sharded over "parallel" grid axes: when N == 1,
    # keep at least 2 pixel tiles so both cores get work.
    if N == 1 and HW_pad >= 256:
        cap = min(cap, HW_pad // 2)
    tile_p = _largest_div_tile(HW_pad, cap)

    grid = (N, HW_pad // tile_p)

    x_spec = pl.BlockSpec((None, Cin, tile_p), lambda n, p: (n, 0, p))
    out_spec = pl.BlockSpec((None, Cout, tile_p), lambda n, p: (n, 0, p))

    if small:
        chunk = _pick_chunk(tile_p)
        kernel = _make_vpu_kernel(Cout, Cin, tile_p, chunk)
        w_in = weight.reshape(Cout, Cin).astype(jnp.float32)   # SMEM scalars
        b_in = bias.astype(jnp.float32)                        # SMEM scalars
        in_specs = [
            x_spec,
            pl.BlockSpec(memory_space=pltpu.MemorySpace.SMEM),
            pl.BlockSpec(memory_space=pltpu.MemorySpace.SMEM),
        ]
    else:
        kernel = _outconv_mxu_kernel
        w_in = weight.reshape(Cout, Cin).astype(x_nchw.dtype)
        b_in = bias.reshape(Cout, 1).astype(jnp.float32)
        in_specs = [
            x_spec,
            pl.BlockSpec((Cout, Cin), lambda n, p: (0, 0)),    # resident weight
            pl.BlockSpec((Cout, 1), lambda n, p: (0, 0)),      # resident bias
        ]

    # Advisory cost hint: memory-bound 1x1 conv.
    cost = pl.CostEstimate(
        flops=2 * N * Cin * Cout * HW_pad,
        transcendentals=0,
        bytes_accessed=(N * (Cin + Cout) * HW_pad * itemsize
                        + Cout * Cin * itemsize + Cout * itemsize),
    )

    # Explicit scoped-VMEM limit: headroom over the double-buffered blocks,
    # while staying inside every chip's physical VMEM (>= 64 MiB).
    vmem_limit = int(min(60 * 1024 * 1024,
                         max(32 * 1024 * 1024, 2 * budget + (4 << 20))))

    out3 = pl.pallas_call(
        kernel,
        out_shape=jax.ShapeDtypeStruct((N, Cout, HW_pad), x_nchw.dtype),
        grid=grid,
        in_specs=in_specs,
        out_specs=out_spec,
        compiler_params=pltpu.CompilerParams(
            dimension_semantics=("parallel", "parallel"),
            vmem_limit_bytes=vmem_limit),
        cost_estimate=cost,
    )(x3, w_in, b_in)

    if HW_pad != HW:
        out3 = out3[:, :, :HW]
    return out3.reshape(N, Cout, H, W)   # free reshape back to NCHW


def outconv_reference(x_nchw, weight, bias):
    # Pure-JAX reference of the 1x1 conv (full-precision for comparison).
    w_mat = weight.reshape(weight.shape[0], weight.shape[1])   # (Cout, Cin)
    y = jnp.einsum("nchw,oc->nohw", x_nchw, w_mat,
                   precision=jax.lax.Precision.HIGHEST)
    return y + bias[None, :, None, None]


# ---------------------------------------------------------------------------
# Test
# ---------------------------------------------------------------------------
if __name__ == "__main__":
    def _run_case(key, N, Cin, H, W, Cout, atol, rtol):
        k_x, k_w, k_b = jax.random.split(key, 3)
        x = jax.random.normal(k_x, (N, Cin, H, W), dtype=jnp.float32)
        # Conv2d(in, out, kernel_size=1): weight (Cout, Cin, 1, 1), bias (Cout,)
        bound = 1.0 / (Cin ** 0.5)
        weight = jax.random.uniform(k_w, (Cout, Cin, 1, 1), jnp.float32, -bound, bound)
        bias = jax.random.uniform(k_b, (Cout,), jnp.float32, -bound, bound)

        out = jax.block_until_ready(outconv_pallas(x, weight, bias))
        ref = outconv_reference(x, weight, bias)
        assert out.shape == (N, Cout, H, W), out.shape
        err = float(jnp.max(jnp.abs(out - ref)))
        assert jnp.allclose(out, ref, atol=atol, rtol=rtol), f"mismatch vs ref: {err}"

    key = jax.random.PRNGKey(0)
    k1, k2, k3 = jax.random.split(key, 3)

    # Small-channel VPU/SMEM path (the typical OutConv head shape).
    _run_case(k1, 2, 4, 16, 16, 3, atol=1e-5, rtol=1e-5)
    # Larger-channel MXU path (precision=HIGHEST -> tight tolerance for free).
    _run_case(k2, 2, 32, 16, 16, 16, atol=1e-4, rtol=1e-4)
    # Ragged spatial size (HW % 128 != 0 -> wrapper pads the pixel axis).
    _run_case(k3, 1, 4, 10, 10, 3, atol=1e-5, rtol=1e-5)

    print("KERNEL_OK")
</pallas_src>

<mosaic_0001>
module attributes {stable_mosaic.version = 11 : i64} {
  func.func @kernel(%arg0: i32, %arg1: i32, %arg2: memref<1x4x256xf32, #tpu.memory_space<vmem>>, %arg3: memref<3x4xf32, #tpu.memory_space<smem>>, %arg4: memref<3xf32, #tpu.memory_space<smem>>, %arg5: memref<1x3x256xf32, #tpu.memory_space<vmem>>) attributes {dimension_semantics = [#tpu.dimension_semantics<parallel>, #tpu.dimension_semantics<parallel>], iteration_bounds = array<i64: 2, 1>, scalar_prefetch = 0 : i64, scratch_operands = 0 : i64, tpu.core_type = #tpu.core_type<tc>, window_params = [{transform_indices = @transform_0, window_bounds = array<i64: 1, 4, 256>}, {transform_indices = @transform_1, window_bounds = array<i64: 3, 4>}, {transform_indices = @transform_2, window_bounds = array<i64: 3>}, {transform_indices = @transform_3, window_bounds = array<i64: 1, 3, 256>}]} {
    %c0_i32 = arith.constant 0 : i32
    %c256_i32 = arith.constant 256 : i32
    %0 = arith.muli %c0_i32, %c256_i32 : i32
    %1 = tpu.assume_multiple %0, 128 : i32
    %c0 = arith.constant 0 : index
    %c0_0 = arith.constant 0 : index
    %2 = arith.index_cast %1 : i32 to index
    %3 = vector.load %arg2[%c0, %c0_0, %2] : memref<1x4x256xf32, #tpu.memory_space<vmem>>, vector<1x4x256xf32>
    %4 = vector.shape_cast %3 : vector<1x4x256xf32> to vector<4x256xf32>
    %5 = vector.extract_strided_slice %4 {offsets = [0, 0], sizes = [1, 256], strides = [1, 1]} : vector<4x256xf32> to vector<1x256xf32>
    %c0_1 = arith.constant 0 : index
    %c0_2 = arith.constant 0 : index
    %6 = memref.load %arg3[%c0_1, %c0_2] : memref<3x4xf32, #tpu.memory_space<smem>>
    %7 = vector.broadcast %6 : f32 to vector<1x256xf32>
    %8 = arith.mulf %5, %7 : vector<1x256xf32>
    %9 = vector.extract_strided_slice %4 {offsets = [1, 0], sizes = [1, 256], strides = [1, 1]} : vector<4x256xf32> to vector<1x256xf32>
    %c0_3 = arith.constant 0 : index
    %c1 = arith.constant 1 : index
    %10 = memref.load %arg3[%c0_3, %c1] : memref<3x4xf32, #tpu.memory_space<smem>>
    %11 = vector.broadcast %10 : f32 to vector<1x256xf32>
    %12 = arith.mulf %9, %11 : vector<1x256xf32>
    %13 = arith.addf %8, %12 : vector<1x256xf32>
    %14 = vector.extract_strided_slice %4 {offsets = [2, 0], sizes = [1, 256], strides = [1, 1]} : vector<4x256xf32> to vector<1x256xf32>
    %c0_4 = arith.constant 0 : index
    %c2 = arith.constant 2 : index
    %15 = memref.load %arg3[%c0_4, %c2] : memref<3x4xf32, #tpu.memory_space<smem>>
    %16 = vector.broadcast %15 : f32 to vector<1x256xf32>
    %17 = arith.mulf %14, %16 : vector<1x256xf32>
    %18 = arith.addf %13, %17 : vector<1x256xf32>
    %19 = vector.extract_strided_slice %4 {offsets = [3, 0], sizes = [1, 256], strides = [1, 1]} : vector<4x256xf32> to vector<1x256xf32>
    %c0_5 = arith.constant 0 : index
    %c3 = arith.constant 3 : index
    %20 = memref.load %arg3[%c0_5, %c3] : memref<3x4xf32, #tpu.memory_space<smem>>
    %21 = vector.broadcast %20 : f32 to vector<1x256xf32>
    %22 = arith.mulf %19, %21 : vector<1x256xf32>
    %23 = arith.addf %18, %22 : vector<1x256xf32>
    %c0_6 = arith.constant 0 : index
    %24 = memref.load %arg4[%c0_6] : memref<3xf32, #tpu.memory_space<smem>>
    %25 = vector.broadcast %24 : f32 to vector<1x256xf32>
    %26 = arith.addf %23, %25 : vector<1x256xf32>
    %27 = vector.extract_strided_slice %4 {offsets = [0, 0], sizes = [1, 256], strides = [1, 1]} : vector<4x256xf32> to vector<1x256xf32>
    %c1_7 = arith.constant 1 : index
    %c0_8 = arith.constant 0 : index
    %28 = memref.load %arg3[%c1_7, %c0_8] : memref<3x4xf32, #tpu.memory_space<smem>>
    %29 = vector.broadcast %28 : f32 to vector<1x256xf32>
    %30 = arith.mulf %27, %29 : vector<1x256xf32>
    %31 = vector.extract_strided_slice %4 {offsets = [1, 0], sizes = [1, 256], strides = [1, 1]} : vector<4x256xf32> to vector<1x256xf32>
    %c1_9 = arith.constant 1 : index
    %c1_10 = arith.constant 1 : index
    %32 = memref.load %arg3[%c1_9, %c1_10] : memref<3x4xf32, #tpu.memory_space<smem>>
    %33 = vector.broadcast %32 : f32 to vector<1x256xf32>
    %34 = arith.mulf %31, %33 : vector<1x256xf32>
    %35 = arith.addf %30, %34 : vector<1x256xf32>
    %36 = vector.extract_strided_slice %4 {offsets = [2, 0], sizes = [1, 256], strides = [1, 1]} : vector<4x256xf32> to vector<1x256xf32>
    %c1_11 = arith.constant 1 : index
    %c2_12 = arith.constant 2 : index
    %37 = memref.load %arg3[%c1_11, %c2_12] : memref<3x4xf32, #tpu.memory_space<smem>>
    %38 = vector.broadcast %37 : f32 to vector<1x256xf32>
    %39 = arith.mulf %36, %38 : vector<1x256xf32>
    %40 = arith.addf %35, %39 : vector<1x256xf32>
    %41 = vector.extract_strided_slice %4 {offsets = [3, 0], sizes = [1, 256], strides = [1, 1]} : vector<4x256xf32> to vector<1x256xf32>
    %c1_13 = arith.constant 1 : index
    %c3_14 = arith.constant 3 : index
    %42 = memref.load %arg3[%c1_13, %c3_14] : memref<3x4xf32, #tpu.memory_space<smem>>
    %43 = vector.broadcast %42 : f32 to vector<1x256xf32>
    %44 = arith.mulf %41, %43 : vector<1x256xf32>
    %45 = arith.addf %40, %44 : vector<1x256xf32>
    %c1_15 = arith.constant 1 : index
    %46 = memref.load %arg4[%c1_15] : memref<3xf32, #tpu.memory_space<smem>>
    %47 = vector.broadcast %46 : f32 to vector<1x256xf32>
    %48 = arith.addf %45, %47 : vector<1x256xf32>
    %49 = vector.extract_strided_slice %4 {offsets = [0, 0], sizes = [1, 256], strides = [1, 1]} : vector<4x256xf32> to vector<1x256xf32>
    %c2_16 = arith.constant 2 : index
    %c0_17 = arith.constant 0 : index
    %50 = memref.load %arg3[%c2_16, %c0_17] : memref<3x4xf32, #tpu.memory_space<smem>>
    %51 = vector.broadcast %50 : f32 to vector<1x256xf32>
    %52 = arith.mulf %49, %51 : vector<1x256xf32>
    %53 = vector.extract_strided_slice %4 {offsets = [1, 0], sizes = [1, 256], strides = [1, 1]} : vector<4x256xf32> to vector<1x256xf32>
    %c2_18 = arith.constant 2 : index
    %c1_19 = arith.constant 1 : index
    %54 = memref.load %arg3[%c2_18, %c1_19] : memref<3x4xf32, #tpu.memory_space<smem>>
    %55 = vector.broadcast %54 : f32 to vector<1x256xf32>
    %56 = arith.mulf %53, %55 : vector<1x256xf32>
    %57 = arith.addf %52, %56 : vector<1x256xf32>
    %58 = vector.extract_strided_slice %4 {offsets = [2, 0], sizes = [1, 256], strides = [1, 1]} : vector<4x256xf32> to vector<1x256xf32>
    %c2_20 = arith.constant 2 : index
    %c2_21 = arith.constant 2 : index
    %59 = memref.load %arg3[%c2_20, %c2_21] : memref<3x4xf32, #tpu.memory_space<smem>>
    %60 = vector.broadcast %59 : f32 to vector<1x256xf32>
    %61 = arith.mulf %58, %60 : vector<1x256xf32>
    %62 = arith.addf %57, %61 : vector<1x256xf32>
    %63 = vector.extract_strided_slice %4 {offsets = [3, 0], sizes = [1, 256], strides = [1, 1]} : vector<4x256xf32> to vector<1x256xf32>
    %c2_22 = arith.constant 2 : index
    %c3_23 = arith.constant 3 : index
    %64 = memref.load %arg3[%c2_22, %c3_23] : memref<3x4xf32, #tpu.memory_space<smem>>
    %65 = vector.broadcast %64 : f32 to vector<1x256xf32>
    %66 = arith.mulf %63, %65 : vector<1x256xf32>
    %67 = arith.addf %62, %66 : vector<1x256xf32>
    %c2_24 = arith.constant 2 : index
    %68 = memref.load %arg4[%c2_24] : memref<3xf32, #tpu.memory_space<smem>>
    %69 = vector.broadcast %68 : f32 to vector<1x256xf32>
    %70 = arith.addf %67, %69 : vector<1x256xf32>
    %71 = tpu.concatenate %26, %48, %70 in 0 : vector<1x256xf32>, vector<1x256xf32>, vector<1x256xf32> -> vector<3x256xf32>
    %c0_25 = arith.constant 0 : index
    %c0_26 = arith.constant 0 : index
    %72 = arith.index_cast %1 : i32 to index
    %73 = vector.load %arg5[%c0_25, %c0_26, %72] : memref<1x3x256xf32, #tpu.memory_space<vmem>>, vector<1x3x256xf32>
    %74 = vector.shape_cast %73 : vector<1x3x256xf32> to vector<3x256xf32>
    %75 = vector.shape_cast %71 : vector<3x256xf32> to vector<1x3x256xf32>
    tpu.vector_store %arg5[%c0_25, %c0_26, %72], %75 {strides = array<i32>} : memref<1x3x256xf32, #tpu.memory_space<vmem>>, vector<1x3x256xf32>,
    %c1_i32 = arith.constant 1 : i32
    return
  }
  func.func @transform_0(%arg0: i32, %arg1: i32) -> (i32, i32, i32) {
    %c0_i32 = arith.constant 0 : i32
    %c0_i32_0 = arith.constant 0 : i32
    return %arg0, %c0_i32, %arg1 : i32, i32, i32
  }
  func.func @transform_1(%arg0: i32, %arg1: i32) -> (i32, i32) {
    %c0_i32 = arith.constant 0 : i32
    %c0_i32_0 = arith.constant 0 : i32
    %c0_i32_1 = arith.constant 0 : i32
    return %c0_i32, %c0_i32_0 : i32, i32
  }
  func.func @transform_2(%arg0: i32, %arg1: i32) -> i32 {
    %c0_i32 = arith.constant 0 : i32
    %c0_i32_0 = arith.constant 0 : i32
    return %c0_i32 : i32
  }
  func.func @transform_3(%arg0: i32, %arg1: i32) -> (i32, i32, i32) {
    %c0_i32 = arith.constant 0 : i32
    %c0_i32_0 = arith.constant 0 : i32
    return %arg0, %c0_i32, %arg1 : i32, i32, i32
  }
}

</mosaic_0001>

<llo_original>
// kernel: tpu_custom_call.1
$region0: #{tpu_custom_call.1}
  #allocation0 [shape = 'u32[]', space=smem, size = 0x4, offset = 0x4, fixed_abs, tag = 'smem constant byte address 0x4 - core index']
  #allocation1 [shape = 'u32[72,128]{1,0:T(1,128)}', space=vmem, size = 0x9000, scoped, tag = 'internal scratch']
  %s0 = inlined_call_operand.hbm [shape: f32[2,4,256], index: 0, kind: input, shape index: {}]
  %s1 = inlined_call_operand.hbm [shape: f32[3,4], index: 1, kind: input, shape index: {}]
  %s2 = inlined_call_operand.vmem [shape: f32[3], index: 2, kind: input, shape index: {}]
  %s3 = inlined_call_operand.vmem [shape: f32[2,3,256], index: 3, kind: output, shape index: {}]
  %s4 = sld [smem:[#allocation0]]
  $region57: #{tpu_custom_call.1} parent=0
    _
  %s6 = ssub.s32 1, %s4
  %s7 = scalar_select 0, %s6, %s4
  $region1: #{tpu_custom_call.1} parent=0
    #allocation2 [shape = 'u8[8192]{0}', space=vmem, size = 0x2000, scoped, tag = 'input window, operand 0']
    #allocation3 [shape = 's32[2]{0}', space=sflag, size = 0x8, scoped, tag = 'scoped memory for tpu_custom_call.1']
    #allocation4 [shape = 's32[2]{0}', space=sflag, size = 0x8, scoped, tag = 'scoped memory for tpu_custom_call.1']
    #allocation5 [shape = 's32[2]{0}', space=sflag, size = 0x8, scoped, tag = 'scoped memory for tpu_custom_call.1']
    #allocation6 [shape = 'u8[2048]{0}', space=smem, size = 0x800, scoped, tag = 'input window, operand 1, single buffered']
    #allocation7 [shape = 'u8[512]{0}', space=smem, size = 0x200, scoped, tag = 'input window, operand 2, single buffered']
    %8 = vsyncpa [#allocation3], 0
    %s9 = scalar_lea.sflag [#allocation3], 1
    %10 = vsyncpa %s9, 0
    %11 = vsyncpa [#allocation4], 0
    %12 = vsyncpa [#allocation5], 0
    loop: start=0, step=1, limit=4
    $region2: #{tpu_custom_call.1} parent=1 // loop_pre_header
      _
    $region3: #{tpu_custom_call.1} parent=1 // loop_header
      %s14 = sphi 0, %s18
      %p15 = scmp.ge.s32.totalorder %s14, 4
      %s21 = sphi 0, %s33
      %s22 = sphi 0, %s29
      %s23 = sphi 0, %s21
      %s24 = sphi 0, %s22
      %s25 = sphi 0, %s23
      %s26 = sphi 0, %s24
      %s38 = sphi 0, %s40
      %s41 = sphi 0, %s38
      %s42 = sphi 0, %s41
      %s58 = sphi 0, %s42
      %s62 = sphi 0, %s62
      %s64 = sphi 0, %s62
      %s65 = sphi 0, %s64
      %s79 = sphi 0, %s65
      %s83 = sphi 0, %s83
      %s85 = sphi 0, %s83
      %s86 = sphi 0, %s85
      %s100 = sphi 0, %s86
      %s108 = sphi 0, %s110
      %s111 = sphi 0, %s108
      %s112 = sphi 0, %s111
      %s128 = sphi 0, %s112
    $region4: #{tpu_custom_call.1} parent=1 // loop_header_branch
      %17 = sbr.rel (%p15) target = $region8
    $region5: #{tpu_custom_call.1} parent=1 // loop_body
      %s19 = ssub.s32 %s14, 1
      %s20 = ssub.s32 %s14, 2
      %s27 = sadd.s32 1, %s22
      %p28 = scmp.ge.s32.totalorder %s27, 1
      %s29 = scalar_select %p28, 0, %s27
      %s30 = sadd.s32 1, %s21
      %s31 = scalar_select %p28, %s30, %s21
      %p32 = scmp.ge.s32.totalorder %s31, 2
      %s33 = scalar_select %p32, 0, %s31
      %s34 = ssub.s32 %s21, %s33
      %s35 = ssub.s32 %s22, %s29
      %s36 = sor.u32 %s34, %s35
      %p37 = scmp.eq.s32.totalorder %s36, 0
      %s39 = sadd.s32 %s38, 1
      %s40 = scalar_select %p37, %s38, %s39
      %p43 = pneg %p37
      %p44 = scmp.eq.s32.totalorder %s14, 1
      %p45 = por %p43, %p44
      %p46 = scmp.ne.s32.totalorder %s38, %s41
      %p47 = scmp.eq.s32.totalorder %s14, 0
      %p48 = por %p46, %p47
      %p49 = scmp.ne.s32.totalorder %s38, %s41
      %p50 = scmp.eq.s32.totalorder %s19, 1
      %p51 = por %p49, %p50
      %p52 = scmp.ne.s32.totalorder %s41, %s42
      %p53 = scmp.eq.s32.totalorder %s19, 0
      %p54 = por %p52, %p53
      %p55 = scmp.ne.s32.totalorder %s41, %s42
      %p56 = scmp.eq.s32.totalorder %s20, 1
      %p57 = por %p55, %p56
      %p59 = scmp.ne.s32.totalorder %s42, %s58
      %p60 = scmp.eq.s32.totalorder %s20, 0
      %p61 = por %p59, %p60
      %s63 = sadd.s32 %s62, 1
      %p66 = scmp.eq.s32.totalorder %s14, 1
      %p67 = scmp.ne.s32.totalorder %s62, %s64
      %p68 = scmp.eq.s32.totalorder %s14, 0
      %p69 = por %p67, %p68
      %p70 = scmp.ne.s32.totalorder %s62, %s64
      %p71 = scmp.eq.s32.totalorder %s19, 1
      %p72 = por %p70, %p71
      %p73 = scmp.ne.s32.totalorder %s64, %s65
      %p74 = scmp.eq.s32.totalorder %s19, 0
      %p75 = por %p73, %p74
      %p76 = scmp.ne.s32.totalorder %s64, %s65
      %p77 = scmp.eq.s32.totalorder %s20, 1
      %p78 = por %p76, %p77
      %p80 = scmp.ne.s32.totalorder %s65, %s79
      %p81 = scmp.eq.s32.totalorder %s20, 0
      %p82 = por %p80, %p81
      %s84 = sadd.s32 %s83, 1
      %p87 = scmp.eq.s32.totalorder %s14, 1
      %p88 = scmp.ne.s32.totalorder %s83, %s85
      %p89 = scmp.eq.s32.totalorder %s14, 0
      %p90 = por %p88, %p89
      %p91 = scmp.ne.s32.totalorder %s83, %s85
      %p92 = scmp.eq.s32.totalorder %s19, 1
      %p93 = por %p91, %p92
      %p94 = scmp.ne.s32.totalorder %s85, %s86
      %p95 = scmp.eq.s32.totalorder %s19, 0
      %p96 = por %p94, %p95
      %p97 = scmp.ne.s32.totalorder %s85, %s86
      %p98 = scmp.eq.s32.totalorder %s20, 1
      %p99 = por %p97, %p98
      %p101 = scmp.ne.s32.totalorder %s86, %s100
      %p102 = scmp.eq.s32.totalorder %s20, 0
      %p103 = por %p101, %p102
      %s104 = ssub.s32 %s21, %s33
      %s105 = ssub.s32 %s22, %s29
      %s106 = sor.u32 %s104, %s105
      %p107 = scmp.eq.s32.totalorder %s106, 0
      %s109 = sadd.s32 %s108, 1
      %s110 = scalar_select %p107, %s108, %s109
      %p113 = pneg %p107
      %p114 = scmp.eq.s32.totalorder %s14, 1
      %p115 = por %p113, %p114
      %p116 = scmp.ne.s32.totalorder %s108, %s111
      %p117 = scmp.eq.s32.totalorder %s14, 0
      %p118 = por %p116, %p117
      %p119 = scmp.ne.s32.totalorder %s108, %s111
      %p120 = scmp.eq.s32.totalorder %s19, 1
      %p121 = por %p119, %p120
      %p122 = scmp.ne.s32.totalorder %s111, %s112
      %p123 = scmp.eq.s32.totalorder %s19, 0
      %p124 = por %p122, %p123
      %p125 = scmp.ne.s32.totalorder %s111, %s112
      %p126 = scmp.eq.s32.totalorder %s20, 1
      %p127 = por %p125, %p126
      %p129 = scmp.ne.s32.totalorder %s112, %s128
      %p130 = scmp.eq.s32.totalorder %s20, 0
      %p131 = por %p129, %p130
      %p132 = scmp.le.s32.totalorder 1, %s14
      %p133 = scmp.lt.s32.totalorder %s14, 3
      %p134 = pnand %p132, %p133
      %p135 = pneg %p134
      // Predicated region
      $region9: #{tpu_custom_call.1} parent=5 // pred_check
        _
      $region10: #{tpu_custom_call.1} parent=5 // pred_check_branch
        %137 = sbr.rel (%p134) target = $region12
      $region11: #{tpu_custom_call.1} parent=5 // pred_region
        %s138 = ssub.s32 %s14, 1
        // Predicated region
        $region13: #{tpu_custom_call.1} parent=11 // pred_check
          %p139 = pneg %p75
        $region14: #{tpu_custom_call.1} parent=11 // pred_check_branch
          %141 = sbr.rel (%p139) target = $region16
        $region15: #{tpu_custom_call.1} parent=11 // pred_region
          %143 = vsyncadd [#allocation4], 0
          %s145 = sshll.u32 %s1, 4
          %s146 = int_to_ptr.hbm [resolvable:$true] %s145
          %148 = dma.hbm_to_smem %s146, 64, [#allocation6], [#allocation4]
        $region16: #{tpu_custom_call.1} parent=11 // pred_fallthru
          _
        // Predicated region
        $region17: #{tpu_custom_call.1} parent=11 // pred_check
          %p149 = pneg %p96
        $region18: #{tpu_custom_call.1} parent=11 // pred_check_branch
          %151 = sbr.rel (%p149) target = $region20
        $region19: #{tpu_custom_call.1} parent=11 // pred_region
          %153 = vsyncadd [#allocation5], 0
          %s155 = sshll.u32 %s2, 4
          %s156 = int_to_ptr.vmem [resolvable:$true] %s155
          %158 = dma.vmem_to_smem %s156, 16, [#allocation7], [#allocation5]
        $region20: #{tpu_custom_call.1} parent=11 // pred_fallthru
          _
      $region12: #{tpu_custom_call.1} parent=5 // pred_fallthru
        _
      %p159 = scmp.lt.s32.totalorder %s14, 2
      // Predicated region
      $region21: #{tpu_custom_call.1} parent=5 // pred_check
        %p160 = pneg %p159
      $region22: #{tpu_custom_call.1} parent=5 // pred_check_branch
        %162 = sbr.rel (%p160) target = $region24
      $region23: #{tpu_custom_call.1} parent=5 // pred_region
        // Predicated region
        $region25: #{tpu_custom_call.1} parent=23 // pred_check
          %p163 = pneg %p48
        $region26: #{tpu_custom_call.1} parent=23 // pred_check_branch
          %165 = sbr.rel (%p163) target = $region28
        $region27: #{tpu_custom_call.1} parent=23 // pred_region
          %s166 = sand.u32 %s38, 1
          %s167 = scalar_lea.sflag [#allocation3], %s166
          %s168 = sand.u32 %s38, 1
          %s169 = smul.addr %s168, 8
          %s170 = scalar_lea.vmem [#allocation2], %s169
          %s171 = smul.u32 2, %s22
          %173 = vsyncadd %s167, 0
          %s174 = smul.addr %s21, 2
          %s175 = sadd.s32 %s171, %s174
          %s176 = smul.addr %s175, 4
          %s177 = scalar_lea.hbm %s0, %s176
          %s179 = sshll.u32 %s177, 4
          %s180 = int_to_ptr.hbm [resolvable:$true] %s179
          %s181 = sshll.u32 %s170, 4
          %s182 = int_to_ptr.vmem [resolvable:$true] %s181
          %184 = dma.hbm_to_vmem [thread:$0]  %s180, 128, %s182, %s167
        $region28: #{tpu_custom_call.1} parent=23 // pred_fallthru
          _
      $region24: #{tpu_custom_call.1} parent=5 // pred_fallthru
        _
      %p185 = scmp.le.s32.totalorder 1, %s14
      %p186 = scmp.lt.s32.totalorder %s14, 3
      %p187 = pnand %p185, %p186
      %p188 = pneg %p187
      // Predicated region
      $region29: #{tpu_custom_call.1} parent=5 // pred_check
        _
      $region30: #{tpu_custom_call.1} parent=5 // pred_check_branch
        %190 = sbr.rel (%p187) target = $region32
      $region31: #{tpu_custom_call.1} parent=5 // pred_region
        %s191 = ssub.s32 %s14, 1
        %s192 = sand.u32 %s41, 1
        %s193 = scalar_lea.sflag [#allocation3], %s192
        %s194 = sand.u32 %s41, 1
        %s195 = smul.addr %s194, 8
        %s196 = scalar_lea.vmem [#allocation2], %s195
        // Predicated region
        $region33: #{tpu_custom_call.1} parent=31 // pred_check
          %p197 = pneg %p54
        $region34: #{tpu_custom_call.1} parent=31 // pred_check_branch
          %199 = sbr.rel (%p197) target = $region36
        $region35: #{tpu_custom_call.1} parent=31 // pred_region
          %201 = dma.done %s193, 128
        $region36: #{tpu_custom_call.1} parent=31 // pred_fallthru
          _
        // Predicated region
        $region37: #{tpu_custom_call.1} parent=31 // pred_check
          %p202 = pneg %p75
        $region38: #{tpu_custom_call.1} parent=31 // pred_check_branch
          %204 = sbr.rel (%p202) target = $region40
        $region39: #{tpu_custom_call.1} parent=31 // pred_region
          %206 = dma.done [#allocation4], 64
        $region40: #{tpu_custom_call.1} parent=31 // pred_fallthru
          _
        // Predicated region
        $region41: #{tpu_custom_call.1} parent=31 // pred_check
          %p207 = pneg %p96
        $region42: #{tpu_custom_call.1} parent=31 // pred_check_branch
          %209 = sbr.rel (%p207) target = $region44
        $region43: #{tpu_custom_call.1} parent=31 // pred_region
          %211 = dma.done [#allocation5], 16
        $region44: #{tpu_custom_call.1} parent=31 // pred_fallthru
          _
        %212 = sfence
        %s213 = sand.u32 %s41, 1
        %s214 = scalar_lea.sflag [#allocation3], %s213
        %s215 = sand.u32 %s41, 1
        %s216 = smul.addr %s215, 8
        %s217 = scalar_lea.vmem [#allocation2], %s216
        %p218 = pneg %p54
        %p219 = pneg %p51
        %p220 = pneg %p75
        %p221 = pneg %p72
        %p222 = pneg %p96
        %p223 = pneg %p93
        %p224 = pneg %p124
        %p225 = pneg %p121
        %s226 = smul.u32 2, %s24
        %p227 = scmp.lt.s32.totalorder %s23, 1
        %s228 = scalar_select %p227, %s23, 1
        %p229 = scmp.lt.s32.totalorder %s226, 1
        %s230 = scalar_select %p229, %s226, 1
        %s231 = smul.addr %s228, 2
        %s232 = sadd.s32 %s230, %s231
        %s233 = smul.addr %s232, 4
        %s234 = scalar_lea.vmem %s3, %s233
        %s235 = smul.u32 2, %s24
        %s236 = smul.u32 2, %s24
        %p237 = scmp.lt.s32.totalorder %s23, 1
        %s238 = scalar_select %p237, %s23, 1
        %p239 = scmp.lt.s32.totalorder %s236, 1
        %s240 = scalar_select %p239, %s236, 1
        %s241 = smul.addr %s238, 2
        %s242 = sadd.s32 %s240, %s241
        %s243 = smul.addr %s242, 4
        %s244 = scalar_lea.vmem %s3, %s243
        %s245 = smul.u32 2, %s24
        %v246 = vld [vmem:[%s196] sm:$0xff]
        %s247 = sld [smem:[#allocation6]]
        %v248 = vstv %s247
        %v249 = vmul.f32 %v246, %v248
        %s250 = sld [smem:[#allocation6 + $0x1]]
        %v251 = vstv %s250
        %v252 = vmul.f32 %v246, %v251
        %v254 = vrot.slane %v252, 5
        %v255 = vrot.slane %v254, 4
        %v257 = vadd.f32 %v249, %v255
        %s258 = sld [smem:[#allocation6 + $0x2]]
        %v259 = vstv %s258
        %v260 = vmul.f32 %v246, %v259
        %v262 = vrot.slane %v260, 6
        %v263 = vrot.slane %v262, 4
        %v265 = vadd.f32 %v257, %v263
        %s266 = sld [smem:[#allocation6 + $0x3]]
        %v267 = vstv %s266
        %v268 = vmul.f32 %v246, %v267
        %v270 = vrot.slane %v268, 7
        %v271 = vrot.slane %v270, 4
        %v273 = vadd.f32 %v265, %v271
        %s274 = sld [smem:[#allocation7]]
        %v275 = vstv %s274
        %v276 = vadd.f32 %v273, %v275
        %s277 = sld [smem:[#allocation6 + $0x80]]
        %v278 = vstv %s277
        %v279 = vmul.f32 %v246, %v278
        %s280 = sld [smem:[#allocation6 + $0x81]]
        %v281 = vstv %s280
        %v282 = vmul.f32 %v246, %v281
        %v284 = vrot.slane %v282, 5
        %v285 = vrot.slane %v284, 4
        %v287 = vadd.f32 %v279, %v285
        %s288 = sld [smem:[#allocation6 + $0x82]]
        %v289 = vstv %s288
        %v290 = vmul.f32 %v246, %v289
        %v292 = vrot.slane %v290, 6
        %v293 = vrot.slane %v292, 4
        %v295 = vadd.f32 %v287, %v293
        %s296 = sld [smem:[#allocation6 + $0x83]]
        %v297 = vstv %s296
        %v298 = vmul.f32 %v246, %v297
        %v300 = vrot.slane %v298, 7
        %v301 = vrot.slane %v300, 4
        %v303 = vadd.f32 %v295, %v301
        %s304 = sld [smem:[#allocation7 + $0x1]]
        %v305 = vstv %s304
        %v306 = vadd.f32 %v303, %v305
        %s307 = sld [smem:[#allocation6 + $0x100]]
        %v308 = vstv %s307
        %v309 = vmul.f32 %v246, %v308
        %s310 = sld [smem:[#allocation6 + $0x101]]
        %v311 = vstv %s310
        %v312 = vmul.f32 %v246, %v311
        %v314 = vrot.slane %v312, 5
        %v315 = vrot.slane %v314, 4
        %v317 = vadd.f32 %v309, %v315
        %s318 = sld [smem:[#allocation6 + $0x102]]
        %v319 = vstv %s318
        %v320 = vmul.f32 %v246, %v319
        %v322 = vrot.slane %v320, 6
        %v323 = vrot.slane %v322, 4
        %v325 = vadd.f32 %v317, %v323
        %s326 = sld [smem:[#allocation6 + $0x103]]
        %v327 = vstv %s326
        %v328 = vmul.f32 %v246, %v327
        %v330 = vrot.slane %v328, 7
        %v331 = vrot.slane %v330, 4
        %v333 = vadd.f32 %v325, %v331
        %s334 = sld [smem:[#allocation7 + $0x2]]
        %v335 = vstv %s334
        %v336 = vadd.f32 %v333, %v335
        %v338 = vperm.slane %v276, 0
        %v339 = vperm.slane %v276, 4
        %v343 = vperm.slane %v306, 0
        %v344 = vperm.slane %v306, 4
        %v348 = vperm.slane %v336, 0
        %v349 = vperm.slane %v336, 4
        %vm352 = vcmask 1040384
        %v353 = vsel %vm352, %v338, %v343
        %v354 = vsel %vm352, %v339, %v344
        %vm355 = vcmask 1041408
        %v356 = vsel %vm355, %v353, %v348
        %v357 = vsel %vm355, %v354, %v349
        %v360 = vrot.slane %v357, 4
        %vm361 = vcmask 1043456
        %v362 = vsel %vm361, %v356, %v360
        %364 = vst [vmem:[%s244] sm:$0x77] %v362
        %s365 = smul.u32 2, %s24
        %p366 = scmp.lt.s32.totalorder %s23, 1
        %s367 = scalar_select %p366, %s23, 1
        %p368 = scmp.lt.s32.totalorder %s365, 1
        %s369 = scalar_select %p368, %s365, 1
        %s370 = smul.addr %s367, 2
        %s371 = sadd.s32 %s369, %s370
        %s372 = smul.addr %s371, 4
        %s373 = scalar_lea.vmem %s3, %s372
        // Predicated region
        $region45: #{tpu_custom_call.1} parent=31 // pred_check
          %p374 = pneg %p121
        $region46: #{tpu_custom_call.1} parent=31 // pred_check_branch
          %376 = sbr.rel (%p374) target = $region48
        $region47: #{tpu_custom_call.1} parent=31 // pred_region
          %s377 = smul.u32 2, %s24
        $region48: #{tpu_custom_call.1} parent=31 // pred_fallthru
          _
      $region32: #{tpu_custom_call.1} parent=5 // pred_fallthru
        _
      %p378 = scmp.le.s32.totalorder 2, %s14
      // Predicated region
      $region49: #{tpu_custom_call.1} parent=5 // pred_check
        %p379 = pneg %p378
      $region50: #{tpu_custom_call.1} parent=5 // pred_check_branch
        %381 = sbr.rel (%p379) target = $region52
      $region51: #{tpu_custom_call.1} parent=5 // pred_region
        %s382 = ssub.s32 %s14, 2
        // Predicated region
        $region53: #{tpu_custom_call.1} parent=51 // pred_check
          %p383 = pneg %p127
        $region54: #{tpu_custom_call.1} parent=51 // pred_check_branch
          %385 = sbr.rel (%p383) target = $region56
        $region55: #{tpu_custom_call.1} parent=51 // pred_region
          %s386 = smul.u32 2, %s26
          %p387 = scmp.lt.s32.totalorder %s25, 1
          %s388 = scalar_select %p387, %s25, 1
          %p389 = scmp.lt.s32.totalorder %s386, 1
          %s390 = scalar_select %p389, %s386, 1
          %s391 = smul.addr %s388, 2
          %s392 = sadd.s32 %s390, %s391
          %s393 = smul.addr %s392, 4
          %s394 = scalar_lea.vmem %s3, %s393
        $region56: #{tpu_custom_call.1} parent=51 // pred_fallthru
          _
      $region52: #{tpu_custom_call.1} parent=5 // pred_fallthru
        _
    $region6: #{tpu_custom_call.1} parent=1 // loop_footer
      %s18 = sadd.s32 1, %s14
    $region7: #{tpu_custom_call.1} parent=1 // loop_footer_branch
      %13 = sbr.rel target = $region3
    $region8: #{tpu_custom_call.1} parent=1 // loop_exit
      _
    %395 = vsyncpa [#allocation3], 1
    %s396 = scalar_lea.sflag [#allocation3], 1
    %397 = vsyncpa %s396, 1
    %398 = vsyncpa [#allocation4], 1
    %s399 = scalar_lea.sflag [#allocation4], 1
    %400 = vsyncpa %s399, 1
    %401 = vsyncpa [#allocation5], 1
    %s402 = scalar_lea.sflag [#allocation5], 1
    %403 = vsyncpa %s402, 1

</llo_original>
